<compile_context>
chip_gen: v7x
topology: tpu7x:2x2x1
jax: 0.10.0
libtpu: 0.0.40
codegen_flags: <defaults>
</compile_context>

<pallas_src>
import math

import jax
import jax.numpy as jnp
from jax.experimental import pallas as pl
from jax.experimental.pallas import tpu as pltpu


def _time_encoder_kernel(t_ref, e_ref, w_ref, b_ref, o_ref, lhs_ref):
    # t_ref  : (TR, KF)     f32  folded time steps (KF per block-row)
    # e_ref  : (3*KF, KC)   bf16 exact 0/1 block-diagonal selection (resident)
    # w_ref  : (1, KC)      f32  KF-times tiled weight              (resident)
    # b_ref  : (1, KC)      f32  KF-times tiled bias                (resident)
    # o_ref  : (TR, KC)     lane-dense output tile (KC % 128 == 0)
    # lhs_ref: (TR, 3*KF)   bf16 scratch for the split LHS
    kf = t_ref.shape[1]
    t = t_ref[...]

    # Exact 3-term bf16 split of the f32 time values: t ~= hi + lo + lo2
    # (error < ~2^-24 relative), so DEFAULT-precision bf16 MXU work reproduces
    # the f32 broadcast exactly -- no 6-pass HIGHEST matmul, no RHS splitting.
    t_hi = t.astype(jnp.bfloat16)
    r1 = t - t_hi.astype(jnp.float32)
    t_lo = r1.astype(jnp.bfloat16)
    t_lo2 = (r1 - t_lo.astype(jnp.float32)).astype(jnp.bfloat16)

    # Assemble the (TR, 3*KF) bf16 LHS in VMEM scratch (cheap static lane
    # stores), then ONE MXU pass broadcasts every t value into its KF*C lanes.
    lhs_ref[:, 0:kf] = t_hi
    lhs_ref[:, kf:2 * kf] = t_lo
    lhs_ref[:, 2 * kf:3 * kf] = t_lo2
    acc = jnp.dot(lhs_ref[...], e_ref[...], preferred_element_type=jnp.float32)

    # Linear weight / bias applied in f32 on the VPU, then cos.
    o_ref[...] = jnp.cos(acc * w_ref[...] + b_ref[...]).astype(o_ref.dtype)


def time_encoder(t: jax.Array, weight: jax.Array, bias: jax.Array,
                 *, out_dtype=jnp.float32,
                 vmem_limit_bytes: int | None = None) -> jax.Array:
    """Pallas implementation of TimeEncoder.forward.

    Args:
      t:      arbitrary-shaped float array (flattened like torch .view(-1, 1)).
      weight: (out_channels, 1) linear weight.
      bias:   (out_channels,)   linear bias.
    Returns:
      (N, out_channels) array (out_dtype, default float32), N = t.size.
    """
    cdiv = lambda a, b: -(-a // b)
    out_channels = int(weight.shape[0])
    n = int(t.size)
    if n == 0:
        return jnp.zeros((0, out_channels), out_dtype)

    # ---- fold factor ---------------------------------------------------------
    # Minimal fold for a lane-dense (multiple-of-128) output row ...
    k_fold = 128 // math.gcd(out_channels, 128)
    # ... widened while the bf16 contraction (3*k_fold) still fits one MXU pass
    # even on v5e's 128-deep MXU and the selection matrix stays small.
    while (3 * (2 * k_fold) <= 128
           and (2 * k_fold) * (2 * k_fold) * out_channels * 6 <= (2 << 20)):
        k_fold *= 2
    kc = k_fold * out_channels

    # ---- generation-aware VMEM budget (single source for cap and limit) -----
    try:
        vmem_cap = int(getattr(pltpu.get_tpu_info(), "vmem_capacity_bytes",
                               64 * 1024 * 1024))
    except Exception:
        vmem_cap = 64 * 1024 * 1024                       # v7x-safe fallback
    vmem_limit = min(int(vmem_cap * 0.7), 88 * 1024 * 1024)
    if vmem_limit_bytes is not None:
        vmem_limit = min(vmem_limit, int(vmem_limit_bytes))

    lane_pad = lambda x: cdiv(x, 128) * 128               # VMEM lane padding
    out_item = jnp.dtype(out_dtype).itemsize
    e_bytes = 3 * k_fold * kc * 2
    resident = 2 * (e_bytes + 2 * kc * 4)                  # E, w, b (x2 buffers)
    per_row = (2 * (kc * out_item + lane_pad(k_fold) * 4)  # out + t, x2 buffers
               + lane_pad(3 * k_fold) * 2)                 # LHS scratch (single)
    avail = max(per_row * 8, vmem_limit - resident - 2 * 1024 * 1024)
    cap_rows = max(8, (avail // per_row) // 8 * 8)

    # ---- grid: balanced, even number of steps for v7x's two TensorCores -----
    rows = cdiv(n, k_fold)
    grid_n = cdiv(rows, cap_rows)
    if rows > 256:
        grid_n = max(grid_n, 2)                            # use both v7x cores
    if grid_n > 1 and grid_n % 2:
        grid_n += 1                                        # avoid 2:1 imbalance
    tile_rows = min(cap_rows, max(8, cdiv(cdiv(rows, grid_n), 8) * 8))
    grid_n = cdiv(rows, tile_rows)
    rows_pad = grid_n * tile_rows
    n_pad = rows_pad * k_fold

    # ---- operands ------------------------------------------------------------
    t_flat = jnp.reshape(t, (-1,)).astype(jnp.float32)
    if n_pad != n:
        t_flat = jnp.pad(t_flat, (0, n_pad - n))
    t2 = t_flat.reshape(rows_pad, k_fold)

    w = weight.astype(jnp.float32).reshape(1, out_channels)
    b = bias.astype(jnp.float32).reshape(1, out_channels)
    w_tiled = jnp.tile(w, (1, k_fold))                     # [0, k*C+c] = w[c]
    b_tiled = jnp.tile(b, (1, k_fold))                     # [0, k*C+c] = b[c]
    # Exact 0/1 block-diagonal selection: sel[k, k*C + c] = 1 (exact in bf16),
    # tiled 3x along the contraction for the (hi, lo, lo2) LHS terms.
    sel = (jnp.eye(k_fold, dtype=jnp.float32)[:, :, None]
           * jnp.ones((out_channels,), jnp.float32)).reshape(k_fold, kc)
    e = jnp.tile(sel, (3, 1)).astype(jnp.bfloat16)         # (3*KF, KC)

    out2 = pl.pallas_call(
        _time_encoder_kernel,
        out_shape=jax.ShapeDtypeStruct((rows_pad, kc), out_dtype),
        grid_spec=pltpu.PrefetchScalarGridSpec(
            num_scalar_prefetch=0,
            grid=(grid_n,),
            in_specs=[
                pl.BlockSpec((tile_rows, k_fold), lambda i: (i, 0)),   # t tile
                pl.BlockSpec((3 * k_fold, kc), lambda i: (0, 0)),      # E
                pl.BlockSpec((1, kc), lambda i: (0, 0)),               # w tiled
                pl.BlockSpec((1, kc), lambda i: (0, 0)),               # b tiled
            ],
            out_specs=pl.BlockSpec((tile_rows, kc), lambda i: (i, 0)),
            scratch_shapes=[pltpu.VMEM((tile_rows, 3 * k_fold), jnp.bfloat16)],
        ),
        compiler_params=pltpu.CompilerParams(
            dimension_semantics=("parallel",),
            vmem_limit_bytes=vmem_limit,
        ),
    )(t2, e, w_tiled, b_tiled)

    # Row-major un-fold back to (N, C): free reshape + slice off padded tail.
    return out2.reshape(n_pad, out_channels)[:n]


def _reference(t, weight, bias):
    # Exact f32 elementwise reference (in_features == 1, so the linear is a
    # broadcasted multiply-add).
    t_flat = jnp.reshape(t, (-1, 1)).astype(jnp.float32)
    w_row = weight.astype(jnp.float32).reshape(1, -1)
    return jnp.cos(t_flat * w_row + bias.astype(jnp.float32).reshape(1, -1))


if __name__ == "__main__":
    out_channels = 32
    key = jax.random.PRNGKey(0)
    k_w, k_b, k_t = jax.random.split(key, 3)

    # Deterministic synthetic parameters (shapes from nn.Linear(1, out_channels)).
    weight = jax.random.uniform(k_w, (out_channels, 1), jnp.float32,
                                minval=-1.0, maxval=1.0)
    bias = jax.random.uniform(k_b, (out_channels,), jnp.float32,
                              minval=-1.0, maxval=1.0)

    # Example timestamps: batch=2, seq=8  ->  N = 16 rows after view(-1, 1).
    t = jax.random.uniform(k_t, (2, 8), jnp.float32, minval=0.0, maxval=10.0)

    out = jax.block_until_ready(time_encoder(t, weight, bias))
    ref = _reference(t, weight, bias)

    assert out.shape == (t.size, out_channels), out.shape
    err = float(jnp.max(jnp.abs(out - ref)))
    assert jnp.allclose(out, ref, atol=1e-4, rtol=1e-5), f"mismatch, max err {err}"

    print("KERNEL_OK")
</pallas_src>

<mosaic_0001>
module attributes {stable_mosaic.version = 11 : i64} {
  func.func @_time_encoder_kernel(%arg0: i32, %arg1: memref<8x32xf32, #tpu.memory_space<vmem>>, %arg2: memref<96x1024xbf16, #tpu.memory_space<vmem>>, %arg3: memref<1x1024xf32, #tpu.memory_space<vmem>>, %arg4: memref<1x1024xf32, #tpu.memory_space<vmem>>, %arg5: memref<8x1024xf32, #tpu.memory_space<vmem>>, %arg6: memref<8x96xbf16, #tpu.memory_space<vmem>>) attributes {dimension_semantics = [#tpu.dimension_semantics<parallel>], iteration_bounds = array<i64: 1>, scalar_prefetch = 0 : i64, scratch_operands = 1 : i64, tpu.core_type = #tpu.core_type<tc>, window_params = [{transform_indices = @transform_0, window_bounds = array<i64: 8, 32>}, {pipeline_mode = #tpu.pipeline_mode<synchronous>, transform_indices = @transform_1, window_bounds = array<i64: 96, 1024>}, {pipeline_mode = #tpu.pipeline_mode<synchronous>, transform_indices = @transform_2, window_bounds = array<i64: 1, 1024>}, {pipeline_mode = #tpu.pipeline_mode<synchronous>, transform_indices = @transform_3, window_bounds = array<i64: 1, 1024>}, {transform_indices = @transform_4, window_bounds = array<i64: 8, 1024>}]} {
    %c0 = arith.constant 0 : index
    %c0_0 = arith.constant 0 : index
    %0 = vector.load %arg1[%c0, %c0_0] : memref<8x32xf32, #tpu.memory_space<vmem>>, vector<8x32xf32>
    %1 = arith.truncf %0 : vector<8x32xf32> to vector<8x32xbf16>
    %2 = arith.extf %1 : vector<8x32xbf16> to vector<8x32xf32>
    %3 = arith.subf %0, %2 : vector<8x32xf32>
    %4 = arith.truncf %3 : vector<8x32xf32> to vector<8x32xbf16>
    %5 = arith.extf %4 : vector<8x32xbf16> to vector<8x32xf32>
    %6 = arith.subf %3, %5 : vector<8x32xf32>
    %7 = arith.truncf %6 : vector<8x32xf32> to vector<8x32xbf16>
    %c0_1 = arith.constant 0 : index
    %c0_2 = arith.constant 0 : index
    %8 = vector.load %arg6[%c0_1, %c0_2] : memref<8x96xbf16, #tpu.memory_space<vmem>>, vector<8x32xbf16>
    tpu.vector_store %arg6[%c0_1, %c0_2], %1 {strides = array<i32>} : memref<8x96xbf16, #tpu.memory_space<vmem>>, vector<8x32xbf16>,
    %c0_3 = arith.constant 0 : index
    %c32 = arith.constant 32 : index
    %9 = vector.load %arg6[%c0_3, %c32] : memref<8x96xbf16, #tpu.memory_space<vmem>>, vector<8x32xbf16>
    tpu.vector_store %arg6[%c0_3, %c32], %4 {strides = array<i32>} : memref<8x96xbf16, #tpu.memory_space<vmem>>, vector<8x32xbf16>,
    %c0_4 = arith.constant 0 : index
    %c64 = arith.constant 64 : index
    %10 = vector.load %arg6[%c0_4, %c64] : memref<8x96xbf16, #tpu.memory_space<vmem>>, vector<8x32xbf16>
    tpu.vector_store %arg6[%c0_4, %c64], %7 {strides = array<i32>} : memref<8x96xbf16, #tpu.memory_space<vmem>>, vector<8x32xbf16>,
    %c0_5 = arith.constant 0 : index
    %c0_6 = arith.constant 0 : index
    %11 = vector.load %arg6[%c0_5, %c0_6] : memref<8x96xbf16, #tpu.memory_space<vmem>>, vector<8x96xbf16>
    %c0_7 = arith.constant 0 : index
    %c0_8 = arith.constant 0 : index
    %12 = vector.load %arg2[%c0_7, %c0_8] : memref<96x1024xbf16, #tpu.memory_space<vmem>>, vector<96x1024xbf16>
    %cst = arith.constant dense<0.000000e+00> : vector<8x1024xf32>
    %13 = tpu.matmul %11, %12, %cst {dimension_numbers = #tpu.dot_dimension_numbers<[1], [0], [0], [1], [0, 0, 1, 1], [], []>} : vector<8x96xbf16>, vector<96x1024xbf16>, vector<8x1024xf32> -> vector<8x1024xf32>
    %c0_9 = arith.constant 0 : index
    %c0_10 = arith.constant 0 : index
    %14 = vector.load %arg3[%c0_9, %c0_10] : memref<1x1024xf32, #tpu.memory_space<vmem>>, vector<1x1024xf32>
    %15 = vector.broadcast %14 : vector<1x1024xf32> to vector<8x1024xf32>
    %16 = arith.mulf %13, %15 : vector<8x1024xf32>
    %c0_11 = arith.constant 0 : index
    %c0_12 = arith.constant 0 : index
    %17 = vector.load %arg4[%c0_11, %c0_12] : memref<1x1024xf32, #tpu.memory_space<vmem>>, vector<1x1024xf32>
    %18 = vector.broadcast %17 : vector<1x1024xf32> to vector<8x1024xf32>
    %19 = arith.addf %16, %18 : vector<8x1024xf32>
    %20 = math.cos %19 : vector<8x1024xf32>
    %c0_13 = arith.constant 0 : index
    %c0_14 = arith.constant 0 : index
    %21 = vector.load %arg5[%c0_13, %c0_14] : memref<8x1024xf32, #tpu.memory_space<vmem>>, vector<8x1024xf32>
    tpu.vector_store %arg5[%c0_13, %c0_14], %20 {strides = array<i32>} : memref<8x1024xf32, #tpu.memory_space<vmem>>, vector<8x1024xf32>,
    return
  }
  func.func @transform_0(%arg0: i32) -> (i32, i32) {
    %c0_i32 = arith.constant 0 : i32
    %c0_i32_0 = arith.constant 0 : i32
    return %arg0, %c0_i32 : i32, i32
  }
  func.func @transform_1(%arg0: i32) -> (i32, i32) {
    %c0_i32 = arith.constant 0 : i32
    %c0_i32_0 = arith.constant 0 : i32
    %c0_i32_1 = arith.constant 0 : i32
    return %c0_i32, %c0_i32_0 : i32, i32
  }
  func.func @transform_2(%arg0: i32) -> (i32, i32) {
    %c0_i32 = arith.constant 0 : i32
    %c0_i32_0 = arith.constant 0 : i32
    %c0_i32_1 = arith.constant 0 : i32
    return %c0_i32, %c0_i32_0 : i32, i32
  }
  func.func @transform_3(%arg0: i32) -> (i32, i32) {
    %c0_i32 = arith.constant 0 : i32
    %c0_i32_0 = arith.constant 0 : i32
    %c0_i32_1 = arith.constant 0 : i32
    return %c0_i32, %c0_i32_0 : i32, i32
  }
  func.func @transform_4(%arg0: i32) -> (i32, i32) {
    %c0_i32 = arith.constant 0 : i32
    %c0_i32_0 = arith.constant 0 : i32
    return %arg0, %c0_i32 : i32, i32
  }
}

</mosaic_0001>

<llo_original>
// kernel: tpu_custom_call.1
$region0: #{tpu_custom_call.1}
  #allocation0 [shape = 'u32[]', space=smem, size = 0x4, offset = 0x4, fixed_abs, tag = 'smem constant byte address 0x4 - core index']
  #allocation1 [shape = 'u32[144,128]{1,0:T(1,128)}', space=vmem, size = 0x12000, scoped, tag = 'internal scratch']
  #allocation2 [shape = 'bf16[8,96]{1,0:T(8,128)(2,1)}', space=vmem, size = 0x800, scoped, tag = 'scratch operand']
  %s0 = inlined_call_operand.hbm [shape: f32[8,32], index: 0, kind: input, shape index: {}]
  %s1 = inlined_call_operand.hbm [shape: bf16[96,1024], index: 1, kind: input, shape index: {}]
  %s2 = inlined_call_operand.hbm [shape: f32[1,1024], index: 2, kind: input, shape index: {}]
  %s3 = inlined_call_operand.vmem [shape: f32[1,1024], index: 3, kind: input, shape index: {}]
  %s4 = inlined_call_operand.hbm [shape: f32[8,1024], index: 4, kind: output, shape index: {}]
  %s5 = sld [smem:[#allocation0]]
  $region38: #{tpu_custom_call.1} parent=0
    _
  %s7 = ssub.s32 1, %s5
  %s8 = scalar_select 0, %s7, %s5
  $region1: #{tpu_custom_call.1} parent=0
    #allocation3 [shape = 'u8[4096]{0}', space=vmem, size = 0x1000, scoped, tag = 'input window, operand 0, single buffered']
    #allocation4 [shape = 's32[1]{0}', space=sflag, size = 0x4, scoped, tag = 'scoped memory for tpu_custom_call.1']
    #allocation5 [shape = 's32[1]{0}', space=sflag, size = 0x4, scoped, tag = 'scoped memory for tpu_custom_call.1']
    #allocation6 [shape = 'u8[196608]{0}', space=vmem, size = 0x30000, scoped, tag = 'input window, operand 1, single buffered']
    #allocation7 [shape = 's32[1]{0}', space=sflag, size = 0x4, scoped, tag = 'scoped memory for tpu_custom_call.1']
    #allocation8 [shape = 'u8[4096]{0}', space=vmem, size = 0x1000, scoped, tag = 'input window, operand 2, single buffered']
    #allocation9 [shape = 'u8[32768]{0}', space=vmem, size = 0x8000, scoped, tag = 'output window, operand 0, single buffered']
    %9 = vsyncpa [#allocation4], 0
    %10 = vsyncpa [#allocation7], 0
    %11 = vsyncpa [#allocation5], 0
    // Predicated region
    $region2: #{tpu_custom_call.1} parent=1 // pred_check
      _
    $region3: #{tpu_custom_call.1} parent=1 // pred_check_branch
      %13 = sbr.rel (0) target = $region5
    $region4: #{tpu_custom_call.1} parent=1 // pred_region
      %s15 = ssub.s32 128, 128
      %16 = vsyncadd [#allocation4], %s15
      %s18 = sshll.u32 [#allocation3], 4
      %s19 = int_to_ptr.vmem [resolvable:$true] %s18
      %21 = dma.hbm_to_vmem [thread:$0]  %s0, 128, %s19, [#allocation4]
    $region5: #{tpu_custom_call.1} parent=1 // pred_fallthru
      _
    // Predicated region
    $region6: #{tpu_custom_call.1} parent=1 // pred_check
      _
    $region7: #{tpu_custom_call.1} parent=1 // pred_check_branch
      %23 = sbr.rel (0) target = $region9
    $region8: #{tpu_custom_call.1} parent=1 // pred_region
      %s25 = ssub.s32 6144, 6144
      %26 = vsyncadd [#allocation7], %s25
      %s27 = sshll.u32 [#allocation6], 4
      %s28 = int_to_ptr.vmem [resolvable:$true] %s27
      %33 = dma.hbm_to_vmem [thread:$0]  %s1, 6144, %s28, [#allocation7], 512, 512, 32
    $region9: #{tpu_custom_call.1} parent=1 // pred_fallthru
      _
    // Predicated region
    $region10: #{tpu_custom_call.1} parent=1 // pred_check
      _
    $region11: #{tpu_custom_call.1} parent=1 // pred_check_branch
      %35 = sbr.rel (0) target = $region13
    $region12: #{tpu_custom_call.1} parent=1 // pred_region
      %s37 = ssub.s32 128, 128
      %38 = vsyncadd [#allocation7], %s37
      %s40 = sshll.u32 [#allocation8], 4
      %s41 = int_to_ptr.vmem [resolvable:$true] %s40
      %43 = dma.hbm_to_vmem [thread:$0]  %s2, 128, %s41, [#allocation7]
    $region13: #{tpu_custom_call.1} parent=1 // pred_fallthru
      _
    // Predicated region
    $region14: #{tpu_custom_call.1} parent=1 // pred_check
      _
    $region15: #{tpu_custom_call.1} parent=1 // pred_check_branch
      %45 = sbr.rel (0) target = $region17
    $region16: #{tpu_custom_call.1} parent=1 // pred_region
      _
    $region17: #{tpu_custom_call.1} parent=1 // pred_fallthru
      _
    // Predicated region
    $region18: #{tpu_custom_call.1} parent=1 // pred_check
      _
    $region19: #{tpu_custom_call.1} parent=1 // pred_check_branch
      %47 = sbr.rel (0) target = $region21
    $region20: #{tpu_custom_call.1} parent=1 // pred_region
      %48 = dma.done [#allocation4], 128
    $region21: #{tpu_custom_call.1} parent=1 // pred_fallthru
      _
    // Predicated region
    $region22: #{tpu_custom_call.1} parent=1 // pred_check
      _
    $region23: #{tpu_custom_call.1} parent=1 // pred_check_branch
      %50 = sbr.rel (0) target = $region25
    $region24: #{tpu_custom_call.1} parent=1 // pred_region
      %51 = dma.done [#allocation7], 6144
    $region25: #{tpu_custom_call.1} parent=1 // pred_fallthru
      _
    // Predicated region
    $region26: #{tpu_custom_call.1} parent=1 // pred_check
      _
    $region27: #{tpu_custom_call.1} parent=1 // pred_check_branch
      %53 = sbr.rel (0) target = $region29
    $region28: #{tpu_custom_call.1} parent=1 // pred_region
      %54 = dma.done [#allocation7], 128
    $region29: #{tpu_custom_call.1} parent=1 // pred_fallthru
      _
    %v56 = vld [vmem:[#allocation3] sm:$0xff]
    %v57 = vpack.c.bf16 %v56, %v56
    %v58 = vunpack.c.l.bf16 %v57
    %v59 = vsub.f32 %v56, %v58
    %v60 = vpack.c.bf16 %v59, %v59
    %v61 = vunpack.c.l.bf16 %v60
    %v62 = vsub.f32 %v59, %v61
    %v63 = vpack.c.bf16 %v62, %v62
    %vm64 = vcmask 257024
    %65 = vst.msk [vmem:[#allocation2] sm:$0xf] %vm64, %v57
    %v67 = vunpack.c.l.b16 %v60
    %v68 = vpack.c.b16 %v67, %v67
    %69 = vrot.lane.b32.xlu0 %v68, 32
    %v70 = vpop.permute.xlu0 %69
    %vm72 = vcmask 519424
    %73 = vst.msk [vmem:[#allocation2] sm:$0xf] %vm72, %v70
    %v75 = vunpack.c.l.b16 %v63
    %v76 = vpack.c.b16 %v75, %v75
    %77 = vrot.lane.b32.xlu0 %v76, 64
    %v78 = vpop.permute.xlu0 %77
    %vm80 = vcmask 781824
    %81 = vst.msk [vmem:[#allocation2] sm:$0xf] %vm80, %v78
    %v82 = vld [vmem:[#allocation2] sm:$0xf]
    %v83 = vld [vmem:[#allocation6] sm:$0xff]
    %v84 = vld [vmem:[#allocation6 + $0x8] sm:$0xff]
    %v85 = vld [vmem:[#allocation6 + $0x10] sm:$0xff]
    %v86 = vld [vmem:[#allocation6 + $0x18] sm:$0xff]
    %v87 = vld [vmem:[#allocation6 + $0x20] sm:$0xff]
    %v88 = vld [vmem:[#allocation6 + $0x28] sm:$0xff]
    %v89 = vld [vmem:[#allocation6 + $0x30] sm:$0xff]
    %v90 = vld [vmem:[#allocation6 + $0x38] sm:$0xff]
    %v91 = vld [vmem:[#allocation6 + $0x40] sm:$0xff]
    %v92 = vld [vmem:[#allocation6 + $0x48] sm:$0xff]
    %v93 = vld [vmem:[#allocation6 + $0x50] sm:$0xff]
    %v94 = vld [vmem:[#allocation6 + $0x58] sm:$0xff]
    %v95 = vld [vmem:[#allocation6 + $0x60] sm:$0xff]
    %v96 = vld [vmem:[#allocation6 + $0x68] sm:$0xff]
    %v97 = vld [vmem:[#allocation6 + $0x70] sm:$0xff]
    %v98 = vld [vmem:[#allocation6 + $0x78] sm:$0xff]
    %v99 = vld [vmem:[#allocation6 + $0x80] sm:$0xff]
    %v100 = vld [vmem:[#allocation6 + $0x88] sm:$0xff]
    %v101 = vld [vmem:[#allocation6 + $0x90] sm:$0xff]
    %v102 = vld [vmem:[#allocation6 + $0x98] sm:$0xff]
    %v103 = vld [vmem:[#allocation6 + $0xa0] sm:$0xff]
    %v104 = vld [vmem:[#allocation6 + $0xa8] sm:$0xff]
    %v105 = vld [vmem:[#allocation6 + $0xb0] sm:$0xff]
    %v106 = vld [vmem:[#allocation6 + $0xb8] sm:$0xff]
    %v107 = vld [vmem:[#allocation6 + $0xc0] sm:$0xff]
    %v108 = vld [vmem:[#allocation6 + $0xc8] sm:$0xff]
    %v109 = vld [vmem:[#allocation6 + $0xd0] sm:$0xff]
    %v110 = vld [vmem:[#allocation6 + $0xd8] sm:$0xff]
    %v111 = vld [vmem:[#allocation6 + $0xe0] sm:$0xff]
    %v112 = vld [vmem:[#allocation6 + $0xe8] sm:$0xff]
    %v113 = vld [vmem:[#allocation6 + $0xf0] sm:$0xff]
    %v114 = vld [vmem:[#allocation6 + $0xf8] sm:$0xff]
    %v115 = vld [vmem:[#allocation6 + $0x100] sm:$0xff]
    %v116 = vld [vmem:[#allocation6 + $0x108] sm:$0xff]
    %v117 = vld [vmem:[#allocation6 + $0x110] sm:$0xff]
    %v118 = vld [vmem:[#allocation6 + $0x118] sm:$0xff]
    %v119 = vld [vmem:[#allocation6 + $0x120] sm:$0xff]
    %v120 = vld [vmem:[#allocation6 + $0x128] sm:$0xff]
    %v121 = vld [vmem:[#allocation6 + $0x130] sm:$0xff]
    %v122 = vld [vmem:[#allocation6 + $0x138] sm:$0xff]
    %v123 = vld [vmem:[#allocation6 + $0x140] sm:$0xff]
    %v124 = vld [vmem:[#allocation6 + $0x148] sm:$0xff]
    %v125 = vld [vmem:[#allocation6 + $0x150] sm:$0xff]
    %v126 = vld [vmem:[#allocation6 + $0x158] sm:$0xff]
    %v127 = vld [vmem:[#allocation6 + $0x160] sm:$0xff]
    %v128 = vld [vmem:[#allocation6 + $0x168] sm:$0xff]
    %v129 = vld [vmem:[#allocation6 + $0x170] sm:$0xff]
    %v130 = vld [vmem:[#allocation6 + $0x178] sm:$0xff]
    %v179 = vunpack.c.l.b16 %v83
    %v180 = vunpack.c.h.b16 %v83
    %v181 = vunpack.c.l.b16 %v84
    %v182 = vunpack.c.h.b16 %v84
    %v183 = vunpack.c.l.b16 %v85
    %v184 = vunpack.c.h.b16 %v85
    %v185 = vunpack.c.l.b16 %v86
    %v186 = vunpack.c.h.b16 %v86
    %v187 = vunpack.c.l.b16 %v87
    %v188 = vunpack.c.h.b16 %v87
    %v189 = vunpack.c.l.b16 %v88
    %v190 = vunpack.c.h.b16 %v88
    %v191 = vunpack.c.l.b16 %v89
    %v192 = vunpack.c.h.b16 %v89
    %v193 = vunpack.c.l.b16 %v90
    %v194 = vunpack.c.h.b16 %v90
    %v195 = vunpack.c.l.b16 %v91
    %v196 = vunpack.c.h.b16 %v91
    %v197 = vunpack.c.l.b16 %v92
    %v198 = vunpack.c.h.b16 %v92
    %v199 = vunpack.c.l.b16 %v93
    %v200 = vunpack.c.h.b16 %v93
    %v201 = vunpack.c.l.b16 %v94
    %v202 = vunpack.c.h.b16 %v94
    %v203 = vunpack.c.l.b16 %v95
    %v204 = vunpack.c.h.b16 %v95
    %v205 = vunpack.c.l.b16 %v96
    %v206 = vunpack.c.h.b16 %v96
    %v207 = vunpack.c.l.b16 %v97
    %v208 = vunpack.c.h.b16 %v97
    %v209 = vunpack.c.l.b16 %v98
    %v210 = vunpack.c.h.b16 %v98
    %v211 = vunpack.c.l.b16 %v99
    %v212 = vunpack.c.h.b16 %v99
    %v213 = vunpack.c.l.b16 %v100
    %v214 = vunpack.c.h.b16 %v100
    %v215 = vunpack.c.l.b16 %v101
    %v216 = vunpack.c.h.b16 %v101
    %v217 = vunpack.c.l.b16 %v102
    %v218 = vunpack.c.h.b16 %v102
    %v219 = vunpack.c.l.b16 %v103
    %v220 = vunpack.c.h.b16 %v103
    %v221 = vunpack.c.l.b16 %v104
    %v222 = vunpack.c.h.b16 %v104
    %v223 = vunpack.c.l.b16 %v105
    %v224 = vunpack.c.h.b16 %v105
    %v225 = vunpack.c.l.b16 %v106
    %v226 = vunpack.c.h.b16 %v106
    %v227 = vunpack.c.l.b16 %v107
    %v228 = vunpack.c.h.b16 %v107
    %v229 = vunpack.c.l.b16 %v108
    %v230 = vunpack.c.h.b16 %v108
    %v231 = vunpack.c.l.b16 %v109
    %v232 = vunpack.c.h.b16 %v109
    %v233 = vunpack.c.l.b16 %v110
    %v234 = vunpack.c.h.b16 %v110
    %v235 = vunpack.c.l.b16 %v111
    %v236 = vunpack.c.h.b16 %v111
    %v237 = vunpack.c.l.b16 %v112
    %v238 = vunpack.c.h.b16 %v112
    %v239 = vunpack.c.l.b16 %v113
    %v240 = vunpack.c.h.b16 %v113
    %v241 = vunpack.c.l.b16 %v114
    %v242 = vunpack.c.h.b16 %v114
    %v243 = vunpack.c.l.b16 %v115
    %v244 = vunpack.c.h.b16 %v115
    %v245 = vunpack.c.l.b16 %v116
    %v246 = vunpack.c.h.b16 %v116
    %v247 = vunpack.c.l.b16 %v117
    %v248 = vunpack.c.h.b16 %v117
    %v249 = vunpack.c.l.b16 %v118
    %v250 = vunpack.c.h.b16 %v118
    %v251 = vunpack.c.l.b16 %v119
    %v252 = vunpack.c.h.b16 %v119
    %v253 = vunpack.c.l.b16 %v120
    %v254 = vunpack.c.h.b16 %v120
    %v255 = vunpack.c.l.b16 %v121
    %v256 = vunpack.c.h.b16 %v121
    %v257 = vunpack.c.l.b16 %v122
    %v258 = vunpack.c.h.b16 %v122
    %v259 = vunpack.c.l.b16 %v123
    %v260 = vunpack.c.h.b16 %v123
    %v261 = vunpack.c.l.b16 %v124
    %v262 = vunpack.c.h.b16 %v124
    %v263 = vunpack.c.l.b16 %v125
    %v264 = vunpack.c.h.b16 %v125
    %v265 = vunpack.c.l.b16 %v126
    %v266 = vunpack.c.h.b16 %v126
    %v267 = vunpack.c.l.b16 %v127
    %v268 = vunpack.c.h.b16 %v127
    %v269 = vunpack.c.l.b16 %v128
    %v270 = vunpack.c.h.b16 %v128
    %v271 = vunpack.c.l.b16 %v129
    %v272 = vunpack.c.h.b16 %v129
    %v273 = vunpack.c.l.b16 %v130
    %v274 = vunpack.c.h.b16 %v130
    %v275 = vpack.c.b16 %v187, %v179
    %v276 = vpack.c.b16 %v188, %v180
    %v277 = vpack.c.b16 %v189, %v181
    %v278 = vpack.c.b16 %v190, %v182
    %v279 = vpack.c.b16 %v191, %v183
    %v280 = vpack.c.b16 %v192, %v184
    %v281 = vpack.c.b16 %v193, %v185
    %v282 = vpack.c.b16 %v194, %v186
    %v283 = vpack.c.b16 %v203, %v195
    %v284 = vpack.c.b16 %v204, %v196
    %v285 = vpack.c.b16 %v205, %v197
    %v286 = vpack.c.b16 %v206, %v198
    %v287 = vpack.c.b16 %v207, %v199
    %v288 = vpack.c.b16 %v208, %v200
    %v289 = vpack.c.b16 %v209, %v201
    %v290 = vpack.c.b16 %v210, %v202
    %v291 = vpack.c.b16 %v219, %v211
    %v292 = vpack.c.b16 %v220, %v212
    %v293 = vpack.c.b16 %v221, %v213
    %v294 = vpack.c.b16 %v222, %v214
    %v295 = vpack.c.b16 %v223, %v215
    %v296 = vpack.c.b16 %v224, %v216
    %v297 = vpack.c.b16 %v225, %v217
    %v298 = vpack.c.b16 %v226, %v218
    %v299 = vpack.c.b16 %v235, %v227
    %v300 = vpack.c.b16 %v236, %v228
    %v301 = vpack.c.b16 %v237, %v229
    %v302 = vpack.c.b16 %v238, %v230
    %v303 = vpack.c.b16 %v239, %v231
    %v304 = vpack.c.b16 %v240, %v232
    %v305 = vpack.c.b16 %v241, %v233
    %v306 = vpack.c.b16 %v242, %v234
    %v307 = vpack.c.b16 %v251, %v243
    %v308 = vpack.c.b16 %v252, %v244
    %v309 = vpack.c.b16 %v253, %v245
    %v310 = vpack.c.b16 %v254, %v246
    %v311 = vpack.c.b16 %v255, %v247
    %v312 = vpack.c.b16 %v256, %v248
    %v313 = vpack.c.b16 %v257, %v249
    %v314 = vpack.c.b16 %v258, %v250
    %v315 = vpack.c.b16 %v267, %v259
    %v316 = vpack.c.b16 %v268, %v260
    %v317 = vpack.c.b16 %v269, %v261
    %v318 = vpack.c.b16 %v270, %v262
    %v319 = vpack.c.b16 %v271, %v263
    %v320 = vpack.c.b16 %v272, %v264
    %v321 = vpack.c.b16 %v273, %v265
    %v322 = vpack.c.b16 %v274, %v266
    %vm371 = vcmask 785408
    %v373 = vsel %vm371, %v82, 0
    %375 = vmatprep.subr.bf16.mxu0 %v276
    %376 = vmatpush1.bf16.msra.mxu0 %v275
    %377 = vmatprep.subr.bf16.mxu0 %v284
    %378 = vmatpush1.bf16.msra.mxu0 %v283
    %379 = vmatprep.subr.bf16.mxu0 %v292
    %380 = vmatpush1.bf16.msra.mxu0 %v291
    %381 = vmatprep.subr.bf16.mxu0 %v300
    %382 = vmatpush1.bf16.msra.mxu0 %v299
    %383 = vmatprep.subr.bf16.mxu0 %v308
    %384 = vmatpush1.bf16.msra.mxu0 %v307
    %385 = vmatprep.subr.bf16.mxu0 %v316
    %386 = vmatpush1.bf16.msra.mxu0 %v315
    %387 = vmatprep.subr.bf16.mxu0 0
    %388 = vmatpush1.bf16.msra.mxu0 0
    %389 = vmatprep.subr.bf16.mxu0 0
    %390 = vmatpush1.bf16.msra.mxu0 0
    %391 = vmatprep.subr.bf16.mxu0 0
    %392 = vmatpush1.bf16.msra.mxu0 0
    %393 = vmatprep.subr.bf16.mxu0 0
    %394 = vmatpush1.bf16.msra.mxu0 0
    %395 = vmatprep.subr.bf16.mxu0 0
    %396 = vmatpush1.bf16.msra.mxu0 0
    %397 = vmatprep.subr.bf16.mxu0 0
    %398 = vmatpush1.bf16.msra.mxu0 0
    %399 = vmatprep.subr.bf16.mxu0 0
    %400 = vmatpush1.bf16.msra.mxu0 0
    %401 = vmatprep.subr.bf16.mxu0 0
    %402 = vmatpush1.bf16.msra.mxu0 0
    %403 = vmatprep.subr.bf16.mxu0 0
    %404 = vmatpush1.bf16.msra.mxu0 0
    %405 = vmatprep.subr.bf16.mxu0 0
    %406 = vmatpush1.bf16.msra.mxu0 0
    %407 = vmatprep.mubr.bf16.mxu0 0
    %408 = vmatmul.mubr.bf16.gmra.mrb[0].mxu0 %v373
    %v409 = vpop.f32.mrb[0].mxu0
    %v410 = vadd.f32 0.0, %v409
    %v411 = vpop.f32.mrb[0].mxu0
    %v412 = vadd.f32 0.0, %v411
    %v413 = vpop.f32.mrb[0].mxu0
    %v414 = vpop.f32.mrb[0].mxu0
    %415 = vdwg.mxu0
    %416 = vmatprep.subr.bf16.mxu0 %v278
    %417 = vmatpush1.bf16.msra.mxu0 %v277
    %418 = vmatprep.subr.bf16.mxu0 %v286
    %419 = vmatpush1.bf16.msra.mxu0 %v285
    %420 = vmatprep.subr.bf16.mxu0 %v294
    %421 = vmatpush1.bf16.msra.mxu0 %v293
    %422 = vmatprep.subr.bf16.mxu0 %v302
    %423 = vmatpush1.bf16.msra.mxu0 %v301
    %424 = vmatprep.subr.bf16.mxu0 %v310
    %425 = vmatpush1.bf16.msra.mxu0 %v309
    %426 = vmatprep.subr.bf16.mxu0 %v318
    %427 = vmatpush1.bf16.msra.mxu0 %v317
    %428 = vmatprep.subr.bf16.mxu0 0
    %429 = vmatpush1.bf16.msra.mxu0 0
    %430 = vmatprep.subr.bf16.mxu0 0
    %431 = vmatpush1.bf16.msra.mxu0 0
    %432 = vmatprep.subr.bf16.mxu0 0
    %433 = vmatpush1.bf16.msra.mxu0 0
    %434 = vmatprep.subr.bf16.mxu0 0
    %435 = vmatpush1.bf16.msra.mxu0 0
    %436 = vmatprep.subr.bf16.mxu0 0
    %437 = vmatpush1.bf16.msra.mxu0 0
    %438 = vmatprep.subr.bf16.mxu0 0
    %439 = vmatpush1.bf16.msra.mxu0 0
    %440 = vmatprep.subr.bf16.mxu0 0
    %441 = vmatpush1.bf16.msra.mxu0 0
    %442 = vmatprep.subr.bf16.mxu0 0
    %443 = vmatpush1.bf16.msra.mxu0 0
    %444 = vmatprep.subr.bf16.mxu0 0
    %445 = vmatpush1.bf16.msra.mxu0 0
    %446 = vmatprep.subr.bf16.mxu0 0
    %447 = vmatpush1.bf16.msra.mxu0 0
    %448 = vmatprep.mubr.bf16.mxu0 0
    %449 = vmatmul.mubr.bf16.gmra.mrb[0].mxu0 %v373
    %v450 = vpop.f32.mrb[0].mxu0
    %v451 = vadd.f32 0.0, %v450
    %v452 = vpop.f32.mrb[0].mxu0
    %v453 = vadd.f32 0.0, %v452
    %v454 = vpop.f32.mrb[0].mxu0
    %v455 = vpop.f32.mrb[0].mxu0
    %456 = vdwg.mxu0
    %457 = vmatprep.subr.bf16.mxu0 %v280
    %458 = vmatpush1.bf16.msra.mxu0 %v279
    %459 = vmatprep.subr.bf16.mxu0 %v288
    %460 = vmatpush1.bf16.msra.mxu0 %v287
    %461 = vmatprep.subr.bf16.mxu0 %v296
    %462 = vmatpush1.bf16.msra.mxu0 %v295
    %463 = vmatprep.subr.bf16.mxu0 %v304
    %464 = vmatpush1.bf16.msra.mxu0 %v303
    %465 = vmatprep.subr.bf16.mxu0 %v312
    %466 = vmatpush1.bf16.msra.mxu0 %v311
    %467 = vmatprep.subr.bf16.mxu0 %v320
    %468 = vmatpush1.bf16.msra.mxu0 %v319
    %469 = vmatprep.subr.bf16.mxu0 0
    %470 = vmatpush1.bf16.msra.mxu0 0
    %471 = vmatprep.subr.bf16.mxu0 0
    %472 = vmatpush1.bf16.msra.mxu0 0
    %473 = vmatprep.subr.bf16.mxu0 0
    %474 = vmatpush1.bf16.msra.mxu0 0
    %475 = vmatprep.subr.bf16.mxu0 0
    %476 = vmatpush1.bf16.msra.mxu0 0
    %477 = vmatprep.subr.bf16.mxu0 0
    %478 = vmatpush1.bf16.msra.mxu0 0
    %479 = vmatprep.subr.bf16.mxu0 0
    %480 = vmatpush1.bf16.msra.mxu0 0
    %481 = vmatprep.subr.bf16.mxu0 0
    %482 = vmatpush1.bf16.msra.mxu0 0
    %483 = vmatprep.subr.bf16.mxu0 0
    %484 = vmatpush1.bf16.msra.mxu0 0
    %485 = vmatprep.subr.bf16.mxu0 0
    %486 = vmatpush1.bf16.msra.mxu0 0
    %487 = vmatprep.subr.bf16.mxu0 0
    %488 = vmatpush1.bf16.msra.mxu0 0
    %489 = vmatprep.mubr.bf16.mxu0 0
    %490 = vmatmul.mubr.bf16.gmra.mrb[0].mxu0 %v373
    %v491 = vpop.f32.mrb[0].mxu0
    %v492 = vadd.f32 0.0, %v491
    %v493 = vpop.f32.mrb[0].mxu0
    %v494 = vadd.f32 0.0, %v493
    %v495 = vpop.f32.mrb[0].mxu0
    %v496 = vpop.f32.mrb[0].mxu0
    %497 = vdwg.mxu0
    %498 = vmatprep.subr.bf16.mxu0 %v282
    %499 = vmatpush1.bf16.msra.mxu0 %v281
    %500 = vmatprep.subr.bf16.mxu0 %v290
    %501 = vmatpush1.bf16.msra.mxu0 %v289
    %502 = vmatprep.subr.bf16.mxu0 %v298
    %503 = vmatpush1.bf16.msra.mxu0 %v297
    %504 = vmatprep.subr.bf16.mxu0 %v306
    %505 = vmatpush1.bf16.msra.mxu0 %v305
    %506 = vmatprep.subr.bf16.mxu0 %v314
    %507 = vmatpush1.bf16.msra.mxu0 %v313
    %508 = vmatprep.subr.bf16.mxu0 %v322
    %509 = vmatpush1.bf16.msra.mxu0 %v321
    %510 = vmatprep.subr.bf16.mxu0 0
    %511 = vmatpush1.bf16.msra.mxu0 0
    %512 = vmatprep.subr.bf16.mxu0 0
    %513 = vmatpush1.bf16.msra.mxu0 0
    %514 = vmatprep.subr.bf16.mxu0 0
    %515 = vmatpush1.bf16.msra.mxu0 0
    %516 = vmatprep.subr.bf16.mxu0 0
    %517 = vmatpush1.bf16.msra.mxu0 0
    %518 = vmatprep.subr.bf16.mxu0 0
    %519 = vmatpush1.bf16.msra.mxu0 0
    %520 = vmatprep.subr.bf16.mxu0 0
    %521 = vmatpush1.bf16.msra.mxu0 0
    %522 = vmatprep.subr.bf16.mxu0 0
    %523 = vmatpush1.bf16.msra.mxu0 0
    %524 = vmatprep.subr.bf16.mxu0 0
    %525 = vmatpush1.bf16.msra.mxu0 0
    %526 = vmatprep.subr.bf16.mxu0 0
    %527 = vmatpush1.bf16.msra.mxu0 0
    %528 = vmatprep.subr.bf16.mxu0 0
    %529 = vmatpush1.bf16.msra.mxu0 0
    %530 = vmatprep.mubr.bf16.mxu0 0
    %531 = vmatmul.mubr.bf16.gmra.mrb[0].mxu0 %v373
    %v532 = vpop.f32.mrb[0].mxu0
    %v533 = vadd.f32 0.0, %v532
    %v534 = vpop.f32.mrb[0].mxu0
    %v535 = vadd.f32 0.0, %v534
    %v536 = vpop.f32.mrb[0].mxu0
    %v537 = vpop.f32.mrb[0].mxu0
    %538 = vdwg.mxu0
    %v539 = vld [vmem:[#allocation8] sm:$0xff]
    %v541 = vlaneseq
    %v542 = vshrl.u32 %v541, 7
    %v543 = vsub.s32 0, %v542
    %v544 = vrot.slane %v539, %v543
    %v545 = vlaneseq
    %v546 = vshrl.u32 %v545, 7
    %v547 = vsub.s32 1, %v546
    %v548 = vrot.slane %v539, %v547
    %v549 = vlaneseq
    %v550 = vshrl.u32 %v549, 7
    %v551 = vsub.s32 2, %v550
    %v552 = vrot.slane %v539, %v551
    %v553 = vlaneseq
    %v554 = vshrl.u32 %v553, 7
    %v555 = vsub.s32 3, %v554
    %v556 = vrot.slane %v539, %v555
    %v557 = vlaneseq
    %v558 = vshrl.u32 %v557, 7
    %v559 = vsub.s32 4, %v558
    %v560 = vrot.slane %v539, %v559
    %v561 = vlaneseq
    %v562 = vshrl.u32 %v561, 7
    %v563 = vsub.s32 5, %v562
    %v564 = vrot.slane %v539, %v563
    %v565 = vlaneseq
    %v566 = vshrl.u32 %v565, 7
    %v567 = vsub.s32 6, %v566
    %v568 = vrot.slane %v539, %v567
    %v569 = vlaneseq
    %v570 = vshrl.u32 %v569, 7
    %v571 = vsub.s32 7, %v570
    %v572 = vrot.slane %v539, %v571
    %v581 = vmul.f32 %v410, %v544
    %v582 = vmul.f32 %v412, %v548
    %v583 = vmul.f32 %v451, %v552
    %v584 = vmul.f32 %v453, %v556
    %v585 = vmul.f32 %v492, %v560
    %v586 = vmul.f32 %v494, %v564
    %v587 = vmul.f32 %v533, %v568
    %v588 = vmul.f32 %v535, %v572
    %v589 = vld [vmem:[%s3] sm:$0xff]
    %v591 = vlaneseq
    %v592 = vshrl.u32 %v591, 7
    %v593 = vsub.s32 0, %v592
    %v594 = vrot.slane %v589, %v593
    %v595 = vlaneseq
    %v596 = vshrl.u32 %v595, 7
    %v597 = vsub.s32 1, %v596
    %v598 = vrot.slane %v589, %v597
    %v599 = vlaneseq
    %v600 = vshrl.u32 %v599, 7
    %v601 = vsub.s32 2, %v600
    %v602 = vrot.slane %v589, %v601
    %v603 = vlaneseq
    %v604 = vshrl.u32 %v603, 7
    %v605 = vsub.s32 3, %v604
    %v606 = vrot.slane %v589, %v605
    %v607 = vlaneseq
    %v608 = vshrl.u32 %v607, 7
    %v609 = vsub.s32 4, %v608
    %v610 = vrot.slane %v589, %v609
    %v611 = vlaneseq
    %v612 = vshrl.u32 %v611, 7
    %v613 = vsub.s32 5, %v612
    %v614 = vrot.slane %v589, %v613
    %v615 = vlaneseq
    %v616 = vshrl.u32 %v615, 7
    %v617 = vsub.s32 6, %v616
    %v618 = vrot.slane %v589, %v617
    %v619 = vlaneseq
    %v620 = vshrl.u32 %v619, 7
    %v621 = vsub.s32 7, %v620
    %v622 = vrot.slane %v589, %v621
    %v631 = vadd.f32 %v581, %v594
    %v632 = vadd.f32 %v582, %v598
    %v633 = vadd.f32 %v583, %v602
    %v634 = vadd.f32 %v584, %v606
    %v635 = vadd.f32 %v585, %v610
    %v636 = vadd.f32 %v586, %v614
    %v637 = vadd.f32 %v587, %v618
    %v638 = vadd.f32 %v588, %v622
    %v639 = vand.u32 2147483647, %v631
    %vm640 = vcmp.le.f32.partialorder %v639, 0.7853982
    %vm641 = vcmp.lt.s32.totalorder %v631, 0
    %v642 = vand.u32 %v631, 2139095040
    %v643 = vshrl.u32 %v642, 23
    %v644 = vsub.s32 %v643, 127
    %v645 = vand.u32 2147483647, %v631
    %v646 = vand.u32 %v645, 8388607
    %v647 = vor.u32 %v646, 8388608
    %v648 = vsub.s32 0, %v647
    %v649 = vadd.s32 %v644, 1
    %vm650 = vcmp.gt.s32.totalorder %v649, 0
    %v651 = vsel %vm650, %v649, 0
    %v652 = vshrl.u32 %v651, 5
    %v653 = vand.u32 %v651, 31
    %v654 = vsub.s32 32, %v653
    %v655 = vshrl.u32 683565275, %v654
    %v656 = vshll.u32 683565275, %v653
    %v657 = vshrl.u32 2475754826, %v654
    %v658 = vor.u32 %v656, %v657
    %v659 = vshll.u32 2475754826, %v653
    %v660 = vshrl.u32 2131351028, %v654
    %v661 = vor.u32 %v659, %v660
    %v662 = vshll.u32 2131351028, %v653
    %v663 = vshrl.u32 2102212464, %v654
    %v664 = vor.u32 %v662, %v663
    %v665 = vshll.u32 2102212464, %v653
    %v666 = vshrl.u32 920167782, %v654
    %v667 = vor.u32 %v665, %v666
    %v668 = vshll.u32 920167782, %v653
    %v669 = vshrl.u32 1326507024, %v654
    %v670 = vor.u32 %v668, %v669
    %vm671 = vcmp.lt.s32.totalorder %v652, 1
    %vm672 = vcmp.lt.s32.totalorder %v652, 2
    %vm673 = vcmp.lt.s32.totalorder %v652, 3
    %vm674 = vcmp.lt.s32.totalorder %v652, 4
    %v675 = vsel %vm671, %v655, %v658
    %v676 = vsel %vm674, %v664, 2102212464
    %v677 = vsel %vm673, %v661, %v676
    %v678 = vsel %vm672, %v675, %v677
    %v679 = vsel %vm671, %v658, %v661
    %v680 = vsel %vm674, %v667, 920167782
    %v681 = vsel %vm673, %v664, %v680
    %v682 = vsel %vm672, %v679, %v681
    %v683 = vsel %vm671, %v661, %v664
    %v684 = vsel %vm674, %v670, 1326507024
    %v685 = vsel %vm673, %v667, %v684
    %v686 = vsel %vm672, %v683, %v685
    %v687 = vshll.u32 %v647, 8
    %v688 = vmul.u32.u64.compose %v687, %v686
    %v689 = vextract.low.u32 %v688
    %v690 = vextract.high.u32 %v688
    %v691 = vmul.u32.u64.compose %v687, %v682
    %v692 = vextract.low.u32 %v691
    %v693 = vextract.high.u32 %v691
    %v694 = vmul.u32 %v687, %v678
    %v695 = vadd.s32 %v690, %v692
    %vm696 = vc.u32 %v690, %v692
    %v697 = vadd.s32 %v693, 1
    %v698 = vsel %vm696, %v697, %v693
    %v699 = vadd.s32 %v694, %v698
    %v700 = vadd.s32 %v699, 536870912
    %v701 = vshrl.u32 %v700, 30
    %v702 = vshll.u32 %v701, 30
    %v703 = vsub.s32 %v699, %v702
    %vm704 = vcmp.lt.s32.totalorder %v703, 0
    %v705 = vsub.s32 0, %v703
    %v706 = vsel %vm704, %v705, %v703
    %v707 = vclz %v706
    %v708 = vsub.s32 %v707, 2
    %vm709 = vcmp.gt.s32.totalorder 0, %v708
    %v710 = vsel %vm709, 0, %v708
    %v711 = vsub.s32 32, %v710
    %v712 = vshll.u32 %v703, %v710
    %v713 = vshrl.u32 %v695, %v711
    %v714 = vor.u32 %v712, %v713
    %v715 = vsub.s32 4294967266, %v710
    %v716 = vadd.s32 %v715, 127
    %v717 = vshll.u32 %v716, 23
    %v718 = vor.u32 4788187, %v717
    %v719 = vand.u32 2147483647, %v718
    %v721 = vcvt.s32.f32 %v714
    %v722 = vmul.f32 %v721, %v719
    %v723 = vxor.u32 %v722, 2147483648
    %v724 = vsel %vm641, %v723, %v722
    %v725 = vsub.s32 4, %v701
    %v726 = vsel %vm641, %v725, %v701
    %v727 = vsel %vm640, %v631, %v724
    %v728 = vsel %vm640, 0, %v726
    %v729 = vcosq.f32.pop %v727
    %v730 = vsinq.f32.pop %v727
    %vm731 = vweird.f32 %v631
    %v732 = vand.u32 %v728, 3
    %vm733 = vcmp.lt.s32.totalorder %v732, 2
    %vm734 = vcmp.eq.s32.totalorder %v732, 0
    %v735 = vxor.u32 %v730, 2147483648
    %v736 = vsel %vm734, %v729, %v735
    %vm737 = vcmp.eq.s32.totalorder %v732, 2
    %v738 = vxor.u32 %v729, 2147483648
    %v739 = vsel %vm737, %v738, %v730
    %v740 = vsel %vm733, %v736, %v739
    %v741 = vsel %vm731, nan, %v740
    %v742 = vand.u32 2147483647, %v632
    %vm743 = vcmp.le.f32.partialorder %v742, 0.7853982
    %vm744 = vcmp.lt.s32.totalorder %v632, 0
    %v745 = vand.u32 %v632, 2139095040
    %v746 = vshrl.u32 %v745, 23
    %v747 = vsub.s32 %v746, 127
    %v748 = vand.u32 2147483647, %v632
    %v749 = vand.u32 %v748, 8388607
    %v750 = vor.u32 %v749, 8388608
    %v751 = vsub.s32 0, %v750
    %v752 = vadd.s32 %v747, 1
    %vm753 = vcmp.gt.s32.totalorder %v752, 0
    %v754 = vsel %vm753, %v752, 0
    %v755 = vshrl.u32 %v754, 5
    %v756 = vand.u32 %v754, 31
    %v757 = vsub.s32 32, %v756
    %v758 = vshrl.u32 683565275, %v757
    %v759 = vshll.u32 683565275, %v756
    %v760 = vshrl.u32 2475754826, %v757
    %v761 = vor.u32 %v759, %v760
    %v762 = vshll.u32 2475754826, %v756
    %v763 = vshrl.u32 2131351028, %v757
    %v764 = vor.u32 %v762, %v763
    %v765 = vshll.u32 2131351028, %v756
    %v766 = vshrl.u32 2102212464, %v757
    %v767 = vor.u32 %v765, %v766
    %v768 = vshll.u32 2102212464, %v756
    %v769 = vshrl.u32 920167782, %v757
    %v770 = vor.u32 %v768, %v769
    %v771 = vshll.u32 920167782, %v756
    %v772 = vshrl.u32 1326507024, %v757
    %v773 = vor.u32 %v771, %v772
    %vm774 = vcmp.lt.s32.totalorder %v755, 1
    %vm775 = vcmp.lt.s32.totalorder %v755, 2
    %vm776 = vcmp.lt.s32.totalorder %v755, 3
    %vm777 = vcmp.lt.s32.totalorder %v755, 4
    %v778 = vsel %vm774, %v758, %v761
    %v779 = vsel %vm777, %v767, 2102212464
    %v780 = vsel %vm776, %v764, %v779
    %v781 = vsel %vm775, %v778, %v780
    %v782 = vsel %vm774, %v761, %v764
    %v783 = vsel %vm777, %v770, 920167782
    %v784 = vsel %vm776, %v767, %v783
    %v785 = vsel %vm775, %v782, %v784
    %v786 = vsel %vm774, %v764, %v767
    %v787 = vsel %vm777, %v773, 1326507024
    %v788 = vsel %vm776, %v770, %v787
    %v789 = vsel %vm775, %v786, %v788
    %v790 = vshll.u32 %v750, 8
    %v791 = vmul.u32.u64.compose %v790, %v789
    %v792 = vextract.low.u32 %v791
    %v793 = vextract.high.u32 %v791
    %v794 = vmul.u32.u64.compose %v790, %v785
    %v795 = vextract.low.u32 %v794
    %v796 = vextract.high.u32 %v794
    %v797 = vmul.u32 %v790, %v781
    %v798 = vadd.s32 %v793, %v795
    %vm799 = vc.u32 %v793, %v795
    %v800 = vadd.s32 %v796, 1
    %v801 = vsel %vm799, %v800, %v796
    %v802 = vadd.s32 %v797, %v801
    %v803 = vadd.s32 %v802, 536870912
    %v804 = vshrl.u32 %v803, 30
    %v805 = vshll.u32 %v804, 30
    %v806 = vsub.s32 %v802, %v805
    %vm807 = vcmp.lt.s32.totalorder %v806, 0
    %v808 = vsub.s32 0, %v806
    %v809 = vsel %vm807, %v808, %v806
    %v810 = vclz %v809
    %v811 = vsub.s32 %v810, 2
    %vm812 = vcmp.gt.s32.totalorder 0, %v811
    %v813 = vsel %vm812, 0, %v811
    %v814 = vsub.s32 32, %v813
    %v815 = vshll.u32 %v806, %v813
    %v816 = vshrl.u32 %v798, %v814
    %v817 = vor.u32 %v815, %v816
    %v818 = vsub.s32 4294967266, %v813
    %v819 = vadd.s32 %v818, 127
    %v820 = vshll.u32 %v819, 23
    %v821 = vor.u32 4788187, %v820
    %v822 = vand.u32 2147483647, %v821
    %v824 = vcvt.s32.f32 %v817
    %v825 = vmul.f32 %v824, %v822
    %v826 = vxor.u32 %v825, 2147483648
    %v827 = vsel %vm744, %v826, %v825
    %v828 = vsub.s32 4, %v804
    %v829 = vsel %vm744, %v828, %v804
    %v830 = vsel %vm743, %v632, %v827
    %v831 = vsel %vm743, 0, %v829
    %v832 = vcosq.f32.pop %v830
    %v833 = vsinq.f32.pop %v830
    %vm834 = vweird.f32 %v632
    %v835 = vand.u32 %v831, 3
    %vm836 = vcmp.lt.s32.totalorder %v835, 2
    %vm837 = vcmp.eq.s32.totalorder %v835, 0
    %v838 = vxor.u32 %v833, 2147483648
    %v839 = vsel %vm837, %v832, %v838
    %vm840 = vcmp.eq.s32.totalorder %v835, 2
    %v841 = vxor.u32 %v832, 2147483648
    %v842 = vsel %vm840, %v841, %v833
    %v843 = vsel %vm836, %v839, %v842
    %v844 = vsel %vm834, nan, %v843
    %v845 = vand.u32 2147483647, %v633
    %vm846 = vcmp.le.f32.partialorder %v845, 0.7853982
    %vm847 = vcmp.lt.s32.totalorder %v633, 0
    %v848 = vand.u32 %v633, 2139095040
    %v849 = vshrl.u32 %v848, 23
    %v850 = vsub.s32 %v849, 127
    %v851 = vand.u32 2147483647, %v633
    %v852 = vand.u32 %v851, 8388607
    %v853 = vor.u32 %v852, 8388608
    %v854 = vsub.s32 0, %v853
    %v855 = vadd.s32 %v850, 1
    %vm856 = vcmp.gt.s32.totalorder %v855, 0
    %v857 = vsel %vm856, %v855, 0
    %v858 = vshrl.u32 %v857, 5
    %v859 = vand.u32 %v857, 31
    %v860 = vsub.s32 32, %v859
    %v861 = vshrl.u32 683565275, %v860
    %v862 = vshll.u32 683565275, %v859
    %v863 = vshrl.u32 2475754826, %v860
    %v864 = vor.u32 %v862, %v863
    %v865 = vshll.u32 2475754826, %v859
    %v866 = vshrl.u32 2131351028, %v860
    %v867 = vor.u32 %v865, %v866
    %v868 = vshll.u32 2131351028, %v859
    %v869 = vshrl.u32 2102212464, %v860
    %v870 = vor.u32 %v868, %v869
    %v871 = vshll.u32 2102212464, %v859
    %v872 = vshrl.u32 920167782, %v860
    %v873 = vor.u32 %v871, %v872
    %v874 = vshll.u32 920167782, %v859
    %v875 = vshrl.u32 1326507024, %v860
    %v876 = vor.u32 %v874, %v875
    %vm877 = vcmp.lt.s32.totalorder %v858, 1
    %vm878 = vcmp.lt.s32.totalorder %v858, 2
    %vm879 = vcmp.lt.s32.totalorder %v858, 3
    %vm880 = vcmp.lt.s32.totalorder %v858, 4
    %v881 = vsel %vm877, %v861, %v864
    %v882 = vsel %vm880, %v870, 2102212464
    %v883 = vsel %vm879, %v867, %v882
    %v884 = vsel %vm878, %v881, %v883
    %v885 = vsel %vm877, %v864, %v867
    %v886 = vsel %vm880, %v873, 920167782
    %v887 = vsel %vm879, %v870, %v886
    %v888 = vsel %vm878, %v885, %v887
    %v889 = vsel %vm877, %v867, %v870
    %v890 = vsel %vm880, %v876, 1326507024
    %v891 = vsel %vm879, %v873, %v890
    %v892 = vsel %vm878, %v889, %v891
    %v893 = vshll.u32 %v853, 8
    %v894 = vmul.u32.u64.compose %v893, %v892
    %v895 = vextract.low.u32 %v894
    %v896 = vextract.high.u32 %v894
    %v897 = vmul.u32.u64.compose %v893, %v888
    %v898 = vextract.low.u32 %v897
    %v899 = vextract.high.u32 %v897
    %v900 = vmul.u32 %v893, %v884
    %v901 = vadd.s32 %v896, %v898
    %vm902 = vc.u32 %v896, %v898
    %v903 = vadd.s32 %v899, 1
    %v904 = vsel %vm902, %v903, %v899
    %v905 = vadd.s32 %v900, %v904
    %v906 = vadd.s32 %v905, 536870912
    %v907 = vshrl.u32 %v906, 30
    %v908 = vshll.u32 %v907, 30
    %v909 = vsub.s32 %v905, %v908
    %vm910 = vcmp.lt.s32.totalorder %v909, 0
    %v911 = vsub.s32 0, %v909
    %v912 = vsel %vm910, %v911, %v909
    %v913 = vclz %v912
    %v914 = vsub.s32 %v913, 2
    %vm915 = vcmp.gt.s32.totalorder 0, %v914
    %v916 = vsel %vm915, 0, %v914
    %v917 = vsub.s32 32, %v916
    %v918 = vshll.u32 %v909, %v916
    %v919 = vshrl.u32 %v901, %v917
    %v920 = vor.u32 %v918, %v919
    %v921 = vsub.s32 4294967266, %v916
    %v922 = vadd.s32 %v921, 127
    %v923 = vshll.u32 %v922, 23
    %v924 = vor.u32 4788187, %v923
    %v925 = vand.u32 2147483647, %v924
    %v927 = vcvt.s32.f32 %v920
    %v928 = vmul.f32 %v927, %v925
    %v929 = vxor.u32 %v928, 2147483648
    %v930 = vsel %vm847, %v929, %v928
    %v931 = vsub.s32 4, %v907
    %v932 = vsel %vm847, %v931, %v907
    %v933 = vsel %vm846, %v633, %v930
    %v934 = vsel %vm846, 0, %v932
    %v935 = vcosq.f32.pop %v933
    %v936 = vsinq.f32.pop %v933
    %vm937 = vweird.f32 %v633
    %v938 = vand.u32 %v934, 3
    %vm939 = vcmp.lt.s32.totalorder %v938, 2
    %vm940 = vcmp.eq.s32.totalorder %v938, 0
    %v941 = vxor.u32 %v936, 2147483648
    %v942 = vsel %vm940, %v935, %v941
    %vm943 = vcmp.eq.s32.totalorder %v938, 2
    %v944 = vxor.u32 %v935, 2147483648
    %v945 = vsel %vm943, %v944, %v936
    %v946 = vsel %vm939, %v942, %v945
    %v947 = vsel %vm937, nan, %v946
    %v948 = vand.u32 2147483647, %v634
    %vm949 = vcmp.le.f32.partialorder %v948, 0.7853982
    %vm950 = vcmp.lt.s32.totalorder %v634, 0
    %v951 = vand.u32 %v634, 2139095040
    %v952 = vshrl.u32 %v951, 23
    %v953 = vsub.s32 %v952, 127
    %v954 = vand.u32 2147483647, %v634
    %v955 = vand.u32 %v954, 8388607
    %v956 = vor.u32 %v955, 8388608
    %v957 = vsub.s32 0, %v956
    %v958 = vadd.s32 %v953, 1
    %vm959 = vcmp.gt.s32.totalorder %v958, 0
    %v960 = vsel %vm959, %v958, 0
    %v961 = vshrl.u32 %v960, 5
    %v962 = vand.u32 %v960, 31
    %v963 = vsub.s32 32, %v962
    %v964 = vshrl.u32 683565275, %v963
    %v965 = vshll.u32 683565275, %v962
    %v966 = vshrl.u32 2475754826, %v963
    %v967 = vor.u32 %v965, %v966
    %v968 = vshll.u32 2475754826, %v962
    %v969 = vshrl.u32 2131351028, %v963
    %v970 = vor.u32 %v968, %v969
    %v971 = vshll.u32 2131351028, %v962
    %v972 = vshrl.u32 2102212464, %v963
    %v973 = vor.u32 %v971, %v972
    %v974 = vshll.u32 2102212464, %v962
    %v975 = vshrl.u32 920167782, %v963
    %v976 = vor.u32 %v974, %v975
    %v977 = vshll.u32 920167782, %v962
    %v978 = vshrl.u32 1326507024, %v963
    %v979 = vor.u32 %v977, %v978
    %vm980 = vcmp.lt.s32.totalorder %v961, 1
    %vm981 = vcmp.lt.s32.totalorder %v961, 2
    %vm982 = vcmp.lt.s32.totalorder %v961, 3
    %vm983 = vcmp.lt.s32.totalorder %v961, 4
    %v984 = vsel %vm980, %v964, %v967
    %v985 = vsel %vm983, %v973, 2102212464
    %v986 = vsel %vm982, %v970, %v985
    %v987 = vsel %vm981, %v984, %v986
    %v988 = vsel %vm980, %v967, %v970
    %v989 = vsel %vm983, %v976, 920167782
    %v990 = vsel %vm982, %v973, %v989
    %v991 = vsel %vm981, %v988, %v990
    %v992 = vsel %vm980, %v970, %v973
    %v993 = vsel %vm983, %v979, 1326507024
    %v994 = vsel %vm982, %v976, %v993
    %v995 = vsel %vm981, %v992, %v994
    %v996 = vshll.u32 %v956, 8
    %v997 = vmul.u32.u64.compose %v996, %v995
    %v998 = vextract.low.u32 %v997
    %v999 = vextract.high.u32 %v997
    %v1000 = vmul.u32.u64.compose %v996, %v991
    %v1001 = vextract.low.u32 %v1000
    %v1002 = vextract.high.u32 %v1000
    %v1003 = vmul.u32 %v996, %v987
    %v1004 = vadd.s32 %v999, %v1001
    %vm1005 = vc.u32 %v999, %v1001
    %v1006 = vadd.s32 %v1002, 1
    %v1007 = vsel %vm1005, %v1006, %v1002
    %v1008 = vadd.s32 %v1003, %v1007
    %v1009 = vadd.s32 %v1008, 536870912
    %v1010 = vshrl.u32 %v1009, 30
    %v1011 = vshll.u32 %v1010, 30
    %v1012 = vsub.s32 %v1008, %v1011
    %vm1013 = vcmp.lt.s32.totalorder %v1012, 0
    %v1014 = vsub.s32 0, %v1012
    %v1015 = vsel %vm1013, %v1014, %v1012
    %v1016 = vclz %v1015
    %v1017 = vsub.s32 %v1016, 2
    %vm1018 = vcmp.gt.s32.totalorder 0, %v1017
    %v1019 = vsel %vm1018, 0, %v1017
    %v1020 = vsub.s32 32, %v1019
    %v1021 = vshll.u32 %v1012, %v1019
    %v1022 = vshrl.u32 %v1004, %v1020
    %v1023 = vor.u32 %v1021, %v1022
    %v1024 = vsub.s32 4294967266, %v1019
    %v1025 = vadd.s32 %v1024, 127
    %v1026 = vshll.u32 %v1025, 23
    %v1027 = vor.u32 4788187, %v1026
    %v1028 = vand.u32 2147483647, %v1027
    %v1030 = vcvt.s32.f32 %v1023
    %v1031 = vmul.f32 %v1030, %v1028
    %v1032 = vxor.u32 %v1031, 2147483648
    %v1033 = vsel %vm950, %v1032, %v1031
    %v1034 = vsub.s32 4, %v1010
    %v1035 = vsel %vm950, %v1034, %v1010
    %v1036 = vsel %vm949, %v634, %v1033
    %v1037 = vsel %vm949, 0, %v1035
    %v1038 = vcosq.f32.pop %v1036
    %v1039 = vsinq.f32.pop %v1036
    %vm1040 = vweird.f32 %v634
    %v1041 = vand.u32 %v1037, 3
    %vm1042 = vcmp.lt.s32.totalorder %v1041, 2
    %vm1043 = vcmp.eq.s32.totalorder %v1041, 0
    %v1044 = vxor.u32 %v1039, 2147483648
    %v1045 = vsel %vm1043, %v1038, %v1044
    %vm1046 = vcmp.eq.s32.totalorder %v1041, 2
    %v1047 = vxor.u32 %v1038, 2147483648
    %v1048 = vsel %vm1046, %v1047, %v1039
    %v1049 = vsel %vm1042, %v1045, %v1048
    %v1050 = vsel %vm1040, nan, %v1049
    %v1051 = vand.u32 2147483647, %v635
    %vm1052 = vcmp.le.f32.partialorder %v1051, 0.7853982
    %vm1053 = vcmp.lt.s32.totalorder %v635, 0
    %v1054 = vand.u32 %v635, 2139095040
    %v1055 = vshrl.u32 %v1054, 23
    %v1056 = vsub.s32 %v1055, 127
    %v1057 = vand.u32 2147483647, %v635
    %v1058 = vand.u32 %v1057, 8388607
    %v1059 = vor.u32 %v1058, 8388608
    %v1060 = vsub.s32 0, %v1059
    %v1061 = vadd.s32 %v1056, 1
    %vm1062 = vcmp.gt.s32.totalorder %v1061, 0
    %v1063 = vsel %vm1062, %v1061, 0
    %v1064 = vshrl.u32 %v1063, 5
    %v1065 = vand.u32 %v1063, 31
    %v1066 = vsub.s32 32, %v1065
    %v1067 = vshrl.u32 683565275, %v1066
    %v1068 = vshll.u32 683565275, %v1065
    %v1069 = vshrl.u32 2475754826, %v1066
    %v1070 = vor.u32 %v1068, %v1069
    %v1071 = vshll.u32 2475754826, %v1065
    %v1072 = vshrl.u32 2131351028, %v1066
    %v1073 = vor.u32 %v1071, %v1072
    %v1074 = vshll.u32 2131351028, %v1065
    %v1075 = vshrl.u32 2102212464, %v1066
    %v1076 = vor.u32 %v1074, %v1075
    %v1077 = vshll.u32 2102212464, %v1065
    %v1078 = vshrl.u32 920167782, %v1066
    %v1079 = vor.u32 %v1077, %v1078
    %v1080 = vshll.u32 920167782, %v1065
    %v1081 = vshrl.u32 1326507024, %v1066
    %v1082 = vor.u32 %v1080, %v1081
    %vm1083 = vcmp.lt.s32.totalorder %v1064, 1
    %vm1084 = vcmp.lt.s32.totalorder %v1064, 2
    %vm1085 = vcmp.lt.s32.totalorder %v1064, 3
    %vm1086 = vcmp.lt.s32.totalorder %v1064, 4
    %v1087 = vsel %vm1083, %v1067, %v1070
    %v1088 = vsel %vm1086, %v1076, 2102212464
    %v1089 = vsel %vm1085, %v1073, %v1088
    %v1090 = vsel %vm1084, %v1087, %v1089
    %v1091 = vsel %vm1083, %v1070, %v1073
    %v1092 = vsel %vm1086, %v1079, 920167782
    %v1093 = vsel %vm1085, %v1076, %v1092
    %v1094 = vsel %vm1084, %v1091, %v1093
    %v1095 = vsel %vm1083, %v1073, %v1076
    %v1096 = vsel %vm1086, %v1082, 1326507024
    %v1097 = vsel %vm1085, %v1079, %v1096
    %v1098 = vsel %vm1084, %v1095, %v1097
    %v1099 = vshll.u32 %v1059, 8
    %v1100 = vmul.u32.u64.compose %v1099, %v1098
    %v1101 = vextract.low.u32 %v1100
    %v1102 = vextract.high.u32 %v1100
    %v1103 = vmul.u32.u64.compose %v1099, %v1094
    %v1104 = vextract.low.u32 %v1103
    %v1105 = vextract.high.u32 %v1103
    %v1106 = vmul.u32 %v1099, %v1090
    %v1107 = vadd.s32 %v1102, %v1104
    %vm1108 = vc.u32 %v1102, %v1104
    %v1109 = vadd.s32 %v1105, 1
    %v1110 = vsel %vm1108, %v1109, %v1105
    %v1111 = vadd.s32 %v1106, %v1110
    %v1112 = vadd.s32 %v1111, 536870912
    %v1113 = vshrl.u32 %v1112, 30
    %v1114 = vshll.u32 %v1113, 30
    %v1115 = vsub.s32 %v1111, %v1114
    %vm1116 = vcmp.lt.s32.totalorder %v1115, 0
    %v1117 = vsub.s32 0, %v1115
    %v1118 = vsel %vm1116, %v1117, %v1115
    %v1119 = vclz %v1118
    %v1120 = vsub.s32 %v1119, 2
    %vm1121 = vcmp.gt.s32.totalorder 0, %v1120
    %v1122 = vsel %vm1121, 0, %v1120
    %v1123 = vsub.s32 32, %v1122
    %v1124 = vshll.u32 %v1115, %v1122
    %v1125 = vshrl.u32 %v1107, %v1123
    %v1126 = vor.u32 %v1124, %v1125
    %v1127 = vsub.s32 4294967266, %v1122
    %v1128 = vadd.s32 %v1127, 127
    %v1129 = vshll.u32 %v1128, 23
    %v1130 = vor.u32 4788187, %v1129
    %v1131 = vand.u32 2147483647, %v1130
    %v1133 = vcvt.s32.f32 %v1126
    %v1134 = vmul.f32 %v1133, %v1131
    %v1135 = vxor.u32 %v1134, 2147483648
    %v1136 = vsel %vm1053, %v1135, %v1134
    %v1137 = vsub.s32 4, %v1113
    %v1138 = vsel %vm1053, %v1137, %v1113
    %v1139 = vsel %vm1052, %v635, %v1136
    %v1140 = vsel %vm1052, 0, %v1138
    %v1141 = vcosq.f32.pop %v1139
    %v1142 = vsinq.f32.pop %v1139
    %vm1143 = vweird.f32 %v635
    %v1144 = vand.u32 %v1140, 3
    %vm1145 = vcmp.lt.s32.totalorder %v1144, 2
    %vm1146 = vcmp.eq.s32.totalorder %v1144, 0
    %v1147 = vxor.u32 %v1142, 2147483648
    %v1148 = vsel %vm1146, %v1141, %v1147
    %vm1149 = vcmp.eq.s32.totalorder %v1144, 2
    %v1150 = vxor.u32 %v1141, 2147483648
    %v1151 = vsel %vm1149, %v1150, %v1142
    %v1152 = vsel %vm1145, %v1148, %v1151
    %v1153 = vsel %vm1143, nan, %v1152
    %v1154 = vand.u32 2147483647, %v636
    %vm1155 = vcmp.le.f32.partialorder %v1154, 0.7853982
    %vm1156 = vcmp.lt.s32.totalorder %v636, 0
    %v1157 = vand.u32 %v636, 2139095040
    %v1158 = vshrl.u32 %v1157, 23
    %v1159 = vsub.s32 %v1158, 127
    %v1160 = vand.u32 2147483647, %v636
    %v1161 = vand.u32 %v1160, 8388607
    %v1162 = vor.u32 %v1161, 8388608
    %v1163 = vsub.s32 0, %v1162
    %v1164 = vadd.s32 %v1159, 1
    %vm1165 = vcmp.gt.s32.totalorder %v1164, 0
    %v1166 = vsel %vm1165, %v1164, 0
    %v1167 = vshrl.u32 %v1166, 5
    %v1168 = vand.u32 %v1166, 31
    %v1169 = vsub.s32 32, %v1168
    %v1170 = vshrl.u32 683565275, %v1169
    %v1171 = vshll.u32 683565275, %v1168
    %v1172 = vshrl.u32 2475754826, %v1169
    %v1173 = vor.u32 %v1171, %v1172
    %v1174 = vshll.u32 2475754826, %v1168
    %v1175 = vshrl.u32 2131351028, %v1169
    %v1176 = vor.u32 %v1174, %v1175
    %v1177 = vshll.u32 2131351028, %v1168
    %v1178 = vshrl.u32 2102212464, %v1169
    %v1179 = vor.u32 %v1177, %v1178
    %v1180 = vshll.u32 2102212464, %v1168
    %v1181 = vshrl.u32 920167782, %v1169
    %v1182 = vor.u32 %v1180, %v1181
    %v1183 = vshll.u32 920167782, %v1168
    %v1184 = vshrl.u32 1326507024, %v1169
    %v1185 = vor.u32 %v1183, %v1184
    %vm1186 = vcmp.lt.s32.totalorder %v1167, 1
    %vm1187 = vcmp.lt.s32.totalorder %v1167, 2
    %vm1188 = vcmp.lt.s32.totalorder %v1167, 3
    %vm1189 = vcmp.lt.s32.totalorder %v1167, 4
    %v1190 = vsel %vm1186, %v1170, %v1173
    %v1191 = vsel %vm1189, %v1179, 2102212464
    %v1192 = vsel %vm1188, %v1176, %v1191
    %v1193 = vsel %vm1187, %v1190, %v1192
    %v1194 = vsel %vm1186, %v1173, %v1176
    %v1195 = vsel %vm1189, %v1182, 920167782
    %v1196 = vsel %vm1188, %v1179, %v1195
    %v1197 = vsel %vm1187, %v1194, %v1196
    %v1198 = vsel %vm1186, %v1176, %v1179
    %v1199 = vsel %vm1189, %v1185, 1326507024
    %v1200 = vsel %vm1188, %v1182, %v1199
    %v1201 = vsel %vm1187, %v1198, %v1200
    %v1202 = vshll.u32 %v1162, 8
    %v1203 = vmul.u32.u64.compose %v1202, %v1201
    %v1204 = vextract.low.u32 %v1203
    %v1205 = vextract.high.u32 %v1203
    %v1206 = vmul.u32.u64.compose %v1202, %v1197
    %v1207 = vextract.low.u32 %v1206
    %v1208 = vextract.high.u32 %v1206
    %v1209 = vmul.u32 %v1202, %v1193
    %v1210 = vadd.s32 %v1205, %v1207
    %vm1211 = vc.u32 %v1205, %v1207
    %v1212 = vadd.s32 %v1208, 1
    %v1213 = vsel %vm1211, %v1212, %v1208
    %v1214 = vadd.s32 %v1209, %v1213
    %v1215 = vadd.s32 %v1214, 536870912
    %v1216 = vshrl.u32 %v1215, 30
    %v1217 = vshll.u32 %v1216, 30
    %v1218 = vsub.s32 %v1214, %v1217
    %vm1219 = vcmp.lt.s32.totalorder %v1218, 0
    %v1220 = vsub.s32 0, %v1218
    %v1221 = vsel %vm1219, %v1220, %v1218
    %v1222 = vclz %v1221
    %v1223 = vsub.s32 %v1222, 2
    %vm1224 = vcmp.gt.s32.totalorder 0, %v1223
    %v1225 = vsel %vm1224, 0, %v1223
    %v1226 = vsub.s32 32, %v1225
    %v1227 = vshll.u32 %v1218, %v1225
    %v1228 = vshrl.u32 %v1210, %v1226
    %v1229 = vor.u32 %v1227, %v1228
    %v1230 = vsub.s32 4294967266, %v1225
    %v1231 = vadd.s32 %v1230, 127
    %v1232 = vshll.u32 %v1231, 23
    %v1233 = vor.u32 4788187, %v1232
    %v1234 = vand.u32 2147483647, %v1233
    %v1236 = vcvt.s32.f32 %v1229
    %v1237 = vmul.f32 %v1236, %v1234
    %v1238 = vxor.u32 %v1237, 2147483648
    %v1239 = vsel %vm1156, %v1238, %v1237
    %v1240 = vsub.s32 4, %v1216
    %v1241 = vsel %vm1156, %v1240, %v1216
    %v1242 = vsel %vm1155, %v636, %v1239
    %v1243 = vsel %vm1155, 0, %v1241
    %v1244 = vcosq.f32.pop %v1242
    %v1245 = vsinq.f32.pop %v1242
    %vm1246 = vweird.f32 %v636
    %v1247 = vand.u32 %v1243, 3
    %vm1248 = vcmp.lt.s32.totalorder %v1247, 2
    %vm1249 = vcmp.eq.s32.totalorder %v1247, 0
    %v1250 = vxor.u32 %v1245, 2147483648
    %v1251 = vsel %vm1249, %v1244, %v1250
    %vm1252 = vcmp.eq.s32.totalorder %v1247, 2
    %v1253 = vxor.u32 %v1244, 2147483648
    %v1254 = vsel %vm1252, %v1253, %v1245
    %v1255 = vsel %vm1248, %v1251, %v1254
    %v1256 = vsel %vm1246, nan, %v1255
    %v1257 = vand.u32 2147483647, %v637
    %vm1258 = vcmp.le.f32.partialorder %v1257, 0.7853982
    %vm1259 = vcmp.lt.s32.totalorder %v637, 0
    %v1260 = vand.u32 %v637, 2139095040
    %v1261 = vshrl.u32 %v1260, 23
    %v1262 = vsub.s32 %v1261, 127
    %v1263 = vand.u32 2147483647, %v637
    %v1264 = vand.u32 %v1263, 8388607
    %v1265 = vor.u32 %v1264, 8388608
    %v1266 = vsub.s32 0, %v1265
    %v1267 = vadd.s32 %v1262, 1
    %vm1268 = vcmp.gt.s32.totalorder %v1267, 0
    %v1269 = vsel %vm1268, %v1267, 0
    %v1270 = vshrl.u32 %v1269, 5
    %v1271 = vand.u32 %v1269, 31
    %v1272 = vsub.s32 32, %v1271
    %v1273 = vshrl.u32 683565275, %v1272
    %v1274 = vshll.u32 683565275, %v1271
    %v1275 = vshrl.u32 2475754826, %v1272
    %v1276 = vor.u32 %v1274, %v1275
    %v1277 = vshll.u32 2475754826, %v1271
    %v1278 = vshrl.u32 2131351028, %v1272
    %v1279 = vor.u32 %v1277, %v1278
    %v1280 = vshll.u32 2131351028, %v1271
    %v1281 = vshrl.u32 2102212464, %v1272
    %v1282 = vor.u32 %v1280, %v1281
    %v1283 = vshll.u32 2102212464, %v1271
    %v1284 = vshrl.u32 920167782, %v1272
    %v1285 = vor.u32 %v1283, %v1284
    %v1286 = vshll.u32 920167782, %v1271
    %v1287 = vshrl.u32 1326507024, %v1272
    %v1288 = vor.u32 %v1286, %v1287
    %vm1289 = vcmp.lt.s32.totalorder %v1270, 1
    %vm1290 = vcmp.lt.s32.totalorder %v1270, 2
    %vm1291 = vcmp.lt.s32.totalorder %v1270, 3
    %vm1292 = vcmp.lt.s32.totalorder %v1270, 4
    %v1293 = vsel %vm1289, %v1273, %v1276
    %v1294 = vsel %vm1292, %v1282, 2102212464
    %v1295 = vsel %vm1291, %v1279, %v1294
    %v1296 = vsel %vm1290, %v1293, %v1295
    %v1297 = vsel %vm1289, %v1276, %v1279
    %v1298 = vsel %vm1292, %v1285, 920167782
    %v1299 = vsel %vm1291, %v1282, %v1298
    %v1300 = vsel %vm1290, %v1297, %v1299
    %v1301 = vsel %vm1289, %v1279, %v1282
    %v1302 = vsel %vm1292, %v1288, 1326507024
    %v1303 = vsel %vm1291, %v1285, %v1302
    %v1304 = vsel %vm1290, %v1301, %v1303
    %v1305 = vshll.u32 %v1265, 8
    %v1306 = vmul.u32.u64.compose %v1305, %v1304
    %v1307 = vextract.low.u32 %v1306
    %v1308 = vextract.high.u32 %v1306
    %v1309 = vmul.u32.u64.compose %v1305, %v1300
    %v1310 = vextract.low.u32 %v1309
    %v1311 = vextract.high.u32 %v1309
    %v1312 = vmul.u32 %v1305, %v1296
    %v1313 = vadd.s32 %v1308, %v1310
    %vm1314 = vc.u32 %v1308, %v1310
    %v1315 = vadd.s32 %v1311, 1
    %v1316 = vsel %vm1314, %v1315, %v1311
    %v1317 = vadd.s32 %v1312, %v1316
    %v1318 = vadd.s32 %v1317, 536870912
    %v1319 = vshrl.u32 %v1318, 30
    %v1320 = vshll.u32 %v1319, 30
    %v1321 = vsub.s32 %v1317, %v1320
    %vm1322 = vcmp.lt.s32.totalorder %v1321, 0
    %v1323 = vsub.s32 0, %v1321
    %v1324 = vsel %vm1322, %v1323, %v1321
    %v1325 = vclz %v1324
    %v1326 = vsub.s32 %v1325, 2
    %vm1327 = vcmp.gt.s32.totalorder 0, %v1326
    %v1328 = vsel %vm1327, 0, %v1326
    %v1329 = vsub.s32 32, %v1328
    %v1330 = vshll.u32 %v1321, %v1328
    %v1331 = vshrl.u32 %v1313, %v1329
    %v1332 = vor.u32 %v1330, %v1331
    %v1333 = vsub.s32 4294967266, %v1328
    %v1334 = vadd.s32 %v1333, 127
    %v1335 = vshll.u32 %v1334, 23
    %v1336 = vor.u32 4788187, %v1335
    %v1337 = vand.u32 2147483647, %v1336
    %v1339 = vcvt.s32.f32 %v1332
    %v1340 = vmul.f32 %v1339, %v1337
    %v1341 = vxor.u32 %v1340, 2147483648
    %v1342 = vsel %vm1259, %v1341, %v1340
    %v1343 = vsub.s32 4, %v1319
    %v1344 = vsel %vm1259, %v1343, %v1319
    %v1345 = vsel %vm1258, %v637, %v1342
    %v1346 = vsel %vm1258, 0, %v1344
    %v1347 = vcosq.f32.pop %v1345
    %v1348 = vsinq.f32.pop %v1345
    %vm1349 = vweird.f32 %v637
    %v1350 = vand.u32 %v1346, 3
    %vm1351 = vcmp.lt.s32.totalorder %v1350, 2
    %vm1352 = vcmp.eq.s32.totalorder %v1350, 0
    %v1353 = vxor.u32 %v1348, 2147483648
    %v1354 = vsel %vm1352, %v1347, %v1353
    %vm1355 = vcmp.eq.s32.totalorder %v1350, 2
    %v1356 = vxor.u32 %v1347, 2147483648
    %v1357 = vsel %vm1355, %v1356, %v1348
    %v1358 = vsel %vm1351, %v1354, %v1357
    %v1359 = vsel %vm1349, nan, %v1358
    %v1360 = vand.u32 2147483647, %v638
    %vm1361 = vcmp.le.f32.partialorder %v1360, 0.7853982
    %vm1362 = vcmp.lt.s32.totalorder %v638, 0
    %v1363 = vand.u32 %v638, 2139095040
    %v1364 = vshrl.u32 %v1363, 23
    %v1365 = vsub.s32 %v1364, 127
    %v1366 = vand.u32 2147483647, %v638
    %v1367 = vand.u32 %v1366, 8388607
    %v1368 = vor.u32 %v1367, 8388608
    %v1369 = vsub.s32 0, %v1368
    %v1370 = vadd.s32 %v1365, 1
    %vm1371 = vcmp.gt.s32.totalorder %v1370, 0
    %v1372 = vsel %vm1371, %v1370, 0
    %v1373 = vshrl.u32 %v1372, 5
    %v1374 = vand.u32 %v1372, 31
    %v1375 = vsub.s32 32, %v1374
    %v1376 = vshrl.u32 683565275, %v1375
    %v1377 = vshll.u32 683565275, %v1374
    %v1378 = vshrl.u32 2475754826, %v1375
    %v1379 = vor.u32 %v1377, %v1378
    %v1380 = vshll.u32 2475754826, %v1374
    %v1381 = vshrl.u32 2131351028, %v1375
    %v1382 = vor.u32 %v1380, %v1381
    %v1383 = vshll.u32 2131351028, %v1374
    %v1384 = vshrl.u32 2102212464, %v1375
    %v1385 = vor.u32 %v1383, %v1384
    %v1386 = vshll.u32 2102212464, %v1374
    %v1387 = vshrl.u32 920167782, %v1375
    %v1388 = vor.u32 %v1386, %v1387
    %v1389 = vshll.u32 920167782, %v1374
    %v1390 = vshrl.u32 1326507024, %v1375
    %v1391 = vor.u32 %v1389, %v1390
    %vm1392 = vcmp.lt.s32.totalorder %v1373, 1
    %vm1393 = vcmp.lt.s32.totalorder %v1373, 2
    %vm1394 = vcmp.lt.s32.totalorder %v1373, 3
    %vm1395 = vcmp.lt.s32.totalorder %v1373, 4
    %v1396 = vsel %vm1392, %v1376, %v1379
    %v1397 = vsel %vm1395, %v1385, 2102212464
    %v1398 = vsel %vm1394, %v1382, %v1397
    %v1399 = vsel %vm1393, %v1396, %v1398
    %v1400 = vsel %vm1392, %v1379, %v1382
    %v1401 = vsel %vm1395, %v1388, 920167782
    %v1402 = vsel %vm1394, %v1385, %v1401
    %v1403 = vsel %vm1393, %v1400, %v1402
    %v1404 = vsel %vm1392, %v1382, %v1385
    %v1405 = vsel %vm1395, %v1391, 1326507024
    %v1406 = vsel %vm1394, %v1388, %v1405
    %v1407 = vsel %vm1393, %v1404, %v1406
    %v1408 = vshll.u32 %v1368, 8
    %v1409 = vmul.u32.u64.compose %v1408, %v1407
    %v1410 = vextract.low.u32 %v1409
    %v1411 = vextract.high.u32 %v1409
    %v1412 = vmul.u32.u64.compose %v1408, %v1403
    %v1413 = vextract.low.u32 %v1412
    %v1414 = vextract.high.u32 %v1412
    %v1415 = vmul.u32 %v1408, %v1399
    %v1416 = vadd.s32 %v1411, %v1413
    %vm1417 = vc.u32 %v1411, %v1413
    %v1418 = vadd.s32 %v1414, 1
    %v1419 = vsel %vm1417, %v1418, %v1414
    %v1420 = vadd.s32 %v1415, %v1419
    %v1421 = vadd.s32 %v1420, 536870912
    %v1422 = vshrl.u32 %v1421, 30
    %v1423 = vshll.u32 %v1422, 30
    %v1424 = vsub.s32 %v1420, %v1423
    %vm1425 = vcmp.lt.s32.totalorder %v1424, 0
    %v1426 = vsub.s32 0, %v1424
    %v1427 = vsel %vm1425, %v1426, %v1424
    %v1428 = vclz %v1427
    %v1429 = vsub.s32 %v1428, 2
    %vm1430 = vcmp.gt.s32.totalorder 0, %v1429
    %v1431 = vsel %vm1430, 0, %v1429
    %v1432 = vsub.s32 32, %v1431
    %v1433 = vshll.u32 %v1424, %v1431
    %v1434 = vshrl.u32 %v1416, %v1432
    %v1435 = vor.u32 %v1433, %v1434
    %v1436 = vsub.s32 4294967266, %v1431
    %v1437 = vadd.s32 %v1436, 127
    %v1438 = vshll.u32 %v1437, 23
    %v1439 = vor.u32 4788187, %v1438
    %v1440 = vand.u32 2147483647, %v1439
    %v1442 = vcvt.s32.f32 %v1435
    %v1443 = vmul.f32 %v1442, %v1440
    %v1444 = vxor.u32 %v1443, 2147483648
    %v1445 = vsel %vm1362, %v1444, %v1443
    %v1446 = vsub.s32 4, %v1422
    %v1447 = vsel %vm1362, %v1446, %v1422
    %v1448 = vsel %vm1361, %v638, %v1445
    %v1449 = vsel %vm1361, 0, %v1447
    %v1450 = vcosq.f32.pop %v1448
    %v1451 = vsinq.f32.pop %v1448
    %vm1452 = vweird.f32 %v638
    %v1453 = vand.u32 %v1449, 3
    %vm1454 = vcmp.lt.s32.totalorder %v1453, 2
    %vm1455 = vcmp.eq.s32.totalorder %v1453, 0
    %v1456 = vxor.u32 %v1451, 2147483648
    %v1457 = vsel %vm1455, %v1450, %v1456
    %vm1458 = vcmp.eq.s32.totalorder %v1453, 2
    %v1459 = vxor.u32 %v1450, 2147483648
    %v1460 = vsel %vm1458, %v1459, %v1451
    %v1461 = vsel %vm1454, %v1457, %v1460
    %v1462 = vsel %vm1452, nan, %v1461
    %1463 = vst [vmem:[#allocation9] sm:$0xff] %v741
    %1464 = vst [vmem:[#allocation9 + $0x8] sm:$0xff] %v844
    %1465 = vst [vmem:[#allocation9 + $0x10] sm:$0xff] %v947
    %1466 = vst [vmem:[#allocation9 + $0x18] sm:$0xff] %v1050
    %1467 = vst [vmem:[#allocation9 + $0x20] sm:$0xff] %v1153
    %1468 = vst [vmem:[#allocation9 + $0x28] sm:$0xff] %v1256
    %1469 = vst [vmem:[#allocation9 + $0x30] sm:$0xff] %v1359
    %1470 = vst [vmem:[#allocation9 + $0x38] sm:$0xff] %v1462
    // Predicated region
    $region30: #{tpu_custom_call.1} parent=1 // pred_check
      _
    $region31: #{tpu_custom_call.1} parent=1 // pred_check_branch
      %1472 = sbr.rel (0) target = $region33
    $region32: #{tpu_custom_call.1} parent=1 // pred_region
      %s1474 = ssub.s32 1024, 1024
      %1475 = vsyncadd [#allocation5], %s1474
      %s1477 = sshll.u32 [#allocation9], 4
      %s1478 = int_to_ptr.vmem [resolvable:$true] %s1477
      %1480 = dma.vmem_to_hbm [thread:$0]  %s1478, 1024, %s4, [#allocation5]
    $region33: #{tpu_custom_call.1} parent=1 // pred_fallthru
      _
    // Predicated region
    $region34: #{tpu_custom_call.1} parent=1 // pred_check
      _
    $region35: #{tpu_custom_call.1} parent=1 // pred_check_branch
      %1482 = sbr.rel (0) target = $region37
    $region36: #{tpu_custom_call.1} parent=1 // pred_region
      %1483 = dma.done [#allocation5], 1024
    $region37: #{tpu_custom_call.1} parent=1 // pred_fallthru
      _
    %1484 = vsyncpa [#allocation4], 1
    %1485 = vsyncpa [#allocation7], 1
    %1486 = vsyncpa [#allocation5], 1

</llo_original>
